<compile_context>
chip_gen: v5e
topology: v5e:2x2
jax: 0.10.0
libtpu: 0.0.40
codegen_flags: <defaults>
</compile_context>

<pallas_src>
import jax
import jax.numpy as jnp
from jax.experimental import pallas as pl
from jax.experimental.pallas import tpu as pltpu


def _round_up(x: int, m: int) -> int:
    return ((x + m - 1) // m) * m


def _linear_kernel(lat_ref, cc_ref, batch_ref,
                   lat_coef_ref, cc_coef_ref, batch_coef_ref,
                   const_ref, out_ref):
    """out_tile = lat@lat_coef + cc@cc_coef + batch@batch_coef + const."""
    acc = jnp.dot(lat_ref[...], lat_coef_ref[...],
                  preferred_element_type=jnp.float32)
    acc = acc + jnp.dot(cc_ref[...], cc_coef_ref[...],
                        preferred_element_type=jnp.float32)
    acc = acc + jnp.dot(batch_ref[...], batch_coef_ref[...],
                        preferred_element_type=jnp.float32)
    out_ref[...] = (acc + const_ref[0, 0]).astype(out_ref.dtype)


def log_size_factor_mean_linear_fwd(lat_coord, cc_mat, batch_mat,
                                    lat_coef, cc_coef, const, batch_coef,
                                    *, tm=8192, input_buffering=None,
                                    vmem_limit_bytes=None):
    N, ndim_lat = lat_coord.shape
    n_cc = cc_mat.shape[1]
    n_batch = batch_mat.shape[1]
    assert cc_mat.shape[0] == N and batch_mat.shape[0] == N
    K = ndim_lat + n_cc + n_batch

    f32 = jnp.float32
    # Common compute dtype for the mat-vecs (no-op casts when already equal;
    # bf16 inputs stay bf16 and accumulate in f32 on the MXU).
    dt = jnp.promote_types(jnp.promote_types(lat_coord.dtype, cc_mat.dtype),
                           batch_mat.dtype)
    lat_coord = lat_coord.astype(dt)
    cc_mat = cc_mat.astype(dt)
    batch_mat = batch_mat.astype(dt)
    lat_coef = jnp.asarray(lat_coef, dt).reshape(ndim_lat, 1)
    cc_coef = jnp.asarray(cc_coef, dt).reshape(n_cc, 1)
    batch_coef = jnp.asarray(batch_coef, dt).reshape(n_batch, 1)
    const_s = jnp.asarray(const, f32).reshape(1, 1)

    # Row tile: multiple of 8, clamped so tiny inputs run in one grid step.
    tm_eff = min(int(tm), _round_up(N, 8))
    tm_eff = max(8, (tm_eff // 8) * 8)
    grid = (pl.cdiv(N, tm_eff),)

    in_depth = 2 if input_buffering is None else max(2, int(input_buffering))
    # VMEM footprint: every row tile (and the (tm,1) output tile) is
    # lane-padded to 128 lanes -> tm * 128 * 4 B per buffer.
    elt_bytes = jnp.dtype(dt).itemsize
    n_row_bufs_bytes = 3 * in_depth * tm_eff * 128 * elt_bytes \
        + 2 * tm_eff * 128 * 4                      # f32 output, double-buffered
    if vmem_limit_bytes is None:
        vmem_limit_bytes = max(32 << 20, n_row_bufs_bytes + (8 << 20))

    def row_spec(width):
        block, imap = (tm_eff, width), (lambda i: (i, 0))
        if input_buffering is None:
            return pl.BlockSpec(block, imap)
        return pl.BlockSpec(block, imap, pipeline_mode=pl.Buffered(in_depth))

    cost = pl.CostEstimate(flops=2 * N * K,
                           transcendentals=0,
                           bytes_accessed=elt_bytes * (N * K + K) + 4 * (N + 1))

    out = pl.pallas_call(
        _linear_kernel,
        out_shape=jax.ShapeDtypeStruct((N, 1), f32),
        grid_spec=pltpu.PrefetchScalarGridSpec(
            num_scalar_prefetch=0,
            grid=grid,
            in_specs=[
                row_spec(ndim_lat),                                 # lat_coord rows
                row_spec(n_cc),                                     # cc_mat rows
                row_spec(n_batch),                                  # batch_mat rows
                pl.BlockSpec((ndim_lat, 1), lambda i: (0, 0)),      # lat_coef (resident)
                pl.BlockSpec((n_cc, 1), lambda i: (0, 0)),          # cc_coef (resident)
                pl.BlockSpec((n_batch, 1), lambda i: (0, 0)),       # batch_coef (resident)
                pl.BlockSpec(memory_space=pltpu.MemorySpace.SMEM),  # const scalar
            ],
            out_specs=pl.BlockSpec((tm_eff, 1), lambda i: (i, 0)),
        ),
        cost_estimate=cost,
        compiler_params=pltpu.CompilerParams(
            dimension_semantics=("parallel",),
            vmem_limit_bytes=int(vmem_limit_bytes)),
    )(lat_coord, cc_mat, batch_mat, lat_coef, cc_coef, batch_coef, const_s)

    return out


if __name__ == "__main__":
    lat_init_scale = 1e-10

    def reference(lat_coord, cc_mat, batch_mat, lat_coef, cc_coef, const,
                  batch_coef):
        return (lat_coord @ lat_coef
                + cc_mat @ cc_coef
                + jnp.broadcast_to(const, (lat_coord.shape[0], 1))
                + batch_mat @ batch_coef)

    # --- Case 1: module-style init (zero coefs), tiny shapes -----------------
    N, ndim_lat, n_batch = 16, 32, 8
    k1, k2, k3, k4 = jax.random.split(jax.random.PRNGKey(0), 4)
    lat_coord = jax.random.normal(k1, (N, ndim_lat), dtype=jnp.float32)
    cc_mat = jax.random.normal(k2, (N, 2), dtype=jnp.float32)
    batch_mat = jax.random.normal(k3, (N, n_batch), dtype=jnp.float32)
    lat_coef = jax.random.normal(k4, (ndim_lat, 1), dtype=jnp.float32) * lat_init_scale
    cc_coef = jnp.zeros((2, 1), jnp.float32)
    const = jnp.zeros((1, 1), jnp.float32)
    batch_coef = jnp.zeros((n_batch, 1), jnp.float32)

    out = jax.block_until_ready(log_size_factor_mean_linear_fwd(
        lat_coord, cc_mat, batch_mat, lat_coef, cc_coef, const, batch_coef))
    ref = reference(lat_coord, cc_mat, batch_mat, lat_coef, cc_coef, const,
                    batch_coef)
    assert out.shape == (N, 1)
    assert jnp.allclose(out, ref, atol=1e-6), "case 1 mismatch vs reference"

    # --- Case 2: non-zero params, N not a multiple of the tile ---------------
    # (multi-step grid with a masked partial last block)
    N2, ndim_lat2, n_batch2 = 300, 32, 8
    ks = jax.random.split(jax.random.PRNGKey(0), 8)
    lat_coord2 = jax.random.normal(ks[0], (N2, ndim_lat2), dtype=jnp.float32)
    cc_mat2 = jax.random.normal(ks[1], (N2, 2), dtype=jnp.float32)
    batch_mat2 = jax.random.normal(ks[2], (N2, n_batch2), dtype=jnp.float32)
    lat_coef2 = jax.random.normal(ks[3], (ndim_lat2, 1), dtype=jnp.float32)
    cc_coef2 = jax.random.normal(ks[4], (2, 1), dtype=jnp.float32)
    const2 = jax.random.normal(ks[5], (1, 1), dtype=jnp.float32)
    batch_coef2 = jax.random.normal(ks[6], (n_batch2, 1), dtype=jnp.float32)

    ref2 = reference(lat_coord2, cc_mat2, batch_mat2, lat_coef2, cc_coef2,
                     const2, batch_coef2)

    out2 = jax.block_until_ready(log_size_factor_mean_linear_fwd(
        lat_coord2, cc_mat2, batch_mat2, lat_coef2, cc_coef2, const2,
        batch_coef2, tm=128))
    assert out2.shape == (N2, 1)
    assert jnp.allclose(out2, ref2, atol=1e-5, rtol=1e-5), "case 2 mismatch vs reference"

    # --- Case 3: same data, default tile (single partial block, tm > N) ------
    out3 = jax.block_until_ready(log_size_factor_mean_linear_fwd(
        lat_coord2, cc_mat2, batch_mat2, lat_coef2, cc_coef2, const2,
        batch_coef2))
    assert out3.shape == (N2, 1)
    assert jnp.allclose(out3, ref2, atol=1e-5, rtol=1e-5), "case 3 mismatch vs reference"

    print("KERNEL_OK")
</pallas_src>

<mosaic_0001>
module attributes {stable_mosaic.version = 11 : i64} {
  func.func @_linear_kernel(%arg0: i32, %arg1: memref<16x32xf32, #tpu.memory_space<vmem>>, %arg2: memref<16x2xf32, #tpu.memory_space<vmem>>, %arg3: memref<16x8xf32, #tpu.memory_space<vmem>>, %arg4: memref<32x1xf32, #tpu.memory_space<vmem>>, %arg5: memref<2x1xf32, #tpu.memory_space<vmem>>, %arg6: memref<8x1xf32, #tpu.memory_space<vmem>>, %arg7: memref<1x1xf32, #tpu.memory_space<smem>>, %arg8: memref<16x1xf32, #tpu.memory_space<vmem>>) attributes {dimension_semantics = [#tpu.dimension_semantics<parallel>], iteration_bounds = array<i64: 1>, scalar_prefetch = 0 : i64, scratch_operands = 0 : i64, tpu.core_type = #tpu.core_type<tc>, window_params = [{transform_indices = @transform_0, window_bounds = array<i64: 16, 32>}, {transform_indices = @transform_1, window_bounds = array<i64: 16, 2>}, {transform_indices = @transform_2, window_bounds = array<i64: 16, 8>}, {pipeline_mode = #tpu.pipeline_mode<synchronous>, transform_indices = @transform_3, window_bounds = array<i64: 32, 1>}, {pipeline_mode = #tpu.pipeline_mode<synchronous>, transform_indices = @transform_4, window_bounds = array<i64: 2, 1>}, {pipeline_mode = #tpu.pipeline_mode<synchronous>, transform_indices = @transform_5, window_bounds = array<i64: 8, 1>}, {transform_indices = @transform_6, window_bounds = array<i64: 1, 1>}, {transform_indices = @transform_7, window_bounds = array<i64: 16, 1>}]} {
    %c0 = arith.constant 0 : index
    %c0_0 = arith.constant 0 : index
    %0 = vector.load %arg1[%c0, %c0_0] : memref<16x32xf32, #tpu.memory_space<vmem>>, vector<16x32xf32>
    %c0_1 = arith.constant 0 : index
    %c0_2 = arith.constant 0 : index
    %1 = vector.load %arg4[%c0_1, %c0_2] : memref<32x1xf32, #tpu.memory_space<vmem>>, vector<32x1xf32>
    %cst = arith.constant dense<0.000000e+00> : vector<16x1xf32>
    %2 = tpu.matmul %0, %1, %cst {dimension_numbers = #tpu.dot_dimension_numbers<[1], [0], [0], [1], [0, 0, 1, 1], [], []>} : vector<16x32xf32>, vector<32x1xf32>, vector<16x1xf32> -> vector<16x1xf32>
    %c0_3 = arith.constant 0 : index
    %c0_4 = arith.constant 0 : index
    %3 = vector.load %arg2[%c0_3, %c0_4] : memref<16x2xf32, #tpu.memory_space<vmem>>, vector<16x2xf32>
    %c0_5 = arith.constant 0 : index
    %c0_6 = arith.constant 0 : index
    %4 = vector.load %arg5[%c0_5, %c0_6] : memref<2x1xf32, #tpu.memory_space<vmem>>, vector<2x1xf32>
    %cst_7 = arith.constant dense<0.000000e+00> : vector<16x1xf32>
    %5 = tpu.matmul %3, %4, %cst_7 {dimension_numbers = #tpu.dot_dimension_numbers<[1], [0], [0], [1], [0, 0, 1, 1], [], []>} : vector<16x2xf32>, vector<2x1xf32>, vector<16x1xf32> -> vector<16x1xf32>
    %6 = arith.addf %2, %5 : vector<16x1xf32>
    %c0_8 = arith.constant 0 : index
    %c0_9 = arith.constant 0 : index
    %7 = vector.load %arg3[%c0_8, %c0_9] : memref<16x8xf32, #tpu.memory_space<vmem>>, vector<16x8xf32>
    %c0_10 = arith.constant 0 : index
    %c0_11 = arith.constant 0 : index
    %8 = vector.load %arg6[%c0_10, %c0_11] : memref<8x1xf32, #tpu.memory_space<vmem>>, vector<8x1xf32>
    %cst_12 = arith.constant dense<0.000000e+00> : vector<16x1xf32>
    %9 = tpu.matmul %7, %8, %cst_12 {dimension_numbers = #tpu.dot_dimension_numbers<[1], [0], [0], [1], [0, 0, 1, 1], [], []>} : vector<16x8xf32>, vector<8x1xf32>, vector<16x1xf32> -> vector<16x1xf32>
    %10 = arith.addf %6, %9 : vector<16x1xf32>
    %c0_13 = arith.constant 0 : index
    %c0_14 = arith.constant 0 : index
    %11 = memref.load %arg7[%c0_13, %c0_14] : memref<1x1xf32, #tpu.memory_space<smem>>
    %12 = vector.broadcast %11 : f32 to vector<16x1xf32>
    %13 = arith.addf %10, %12 : vector<16x1xf32>
    %c0_15 = arith.constant 0 : index
    %c0_16 = arith.constant 0 : index
    %14 = vector.load %arg8[%c0_15, %c0_16] : memref<16x1xf32, #tpu.memory_space<vmem>>, vector<16x1xf32>
    tpu.vector_store %arg8[%c0_15, %c0_16], %13 {strides = array<i32>} : memref<16x1xf32, #tpu.memory_space<vmem>>, vector<16x1xf32>,
    return
  }
  func.func @transform_0(%arg0: i32) -> (i32, i32) {
    %c0_i32 = arith.constant 0 : i32
    %c0_i32_0 = arith.constant 0 : i32
    return %arg0, %c0_i32 : i32, i32
  }
  func.func @transform_1(%arg0: i32) -> (i32, i32) {
    %c0_i32 = arith.constant 0 : i32
    %c0_i32_0 = arith.constant 0 : i32
    return %arg0, %c0_i32 : i32, i32
  }
  func.func @transform_2(%arg0: i32) -> (i32, i32) {
    %c0_i32 = arith.constant 0 : i32
    %c0_i32_0 = arith.constant 0 : i32
    return %arg0, %c0_i32 : i32, i32
  }
  func.func @transform_3(%arg0: i32) -> (i32, i32) {
    %c0_i32 = arith.constant 0 : i32
    %c0_i32_0 = arith.constant 0 : i32
    %c0_i32_1 = arith.constant 0 : i32
    return %c0_i32, %c0_i32_0 : i32, i32
  }
  func.func @transform_4(%arg0: i32) -> (i32, i32) {
    %c0_i32 = arith.constant 0 : i32
    %c0_i32_0 = arith.constant 0 : i32
    %c0_i32_1 = arith.constant 0 : i32
    return %c0_i32, %c0_i32_0 : i32, i32
  }
  func.func @transform_5(%arg0: i32) -> (i32, i32) {
    %c0_i32 = arith.constant 0 : i32
    %c0_i32_0 = arith.constant 0 : i32
    %c0_i32_1 = arith.constant 0 : i32
    return %c0_i32, %c0_i32_0 : i32, i32
  }
  func.func @transform_6(%arg0: i32) -> (i32, i32) {
    %c0_i32 = arith.constant 0 : i32
    %c0_i32_0 = arith.constant 0 : i32
    %c0_i32_1 = arith.constant 0 : i32
    return %c0_i32, %c0_i32_0 : i32, i32
  }
  func.func @transform_7(%arg0: i32) -> (i32, i32) {
    %c0_i32 = arith.constant 0 : i32
    %c0_i32_0 = arith.constant 0 : i32
    return %arg0, %c0_i32 : i32, i32
  }
}

</mosaic_0001>

<llo_original>
// kernel: tpu_custom_call.1
$region0: #{tpu_custom_call.1}
  #allocation0 [shape = 'u32[]', space=smem, size = 0x4, offset = 0x4, fixed_abs, tag = 'smem constant byte address 0x4 - core index']
  #allocation1 [shape = 'u32[72,128]{1,0:T(1,128)}', space=vmem, size = 0x9000, scoped, tag = 'internal scratch']
  #allocation2 [shape = 'f32[1,1]{1,0:T(1,128)S(6)}', space=smem, size = 0x200, scoped, tag = 'scoped memory for tpu_custom_call.1']
  %s0 = inlined_call_operand.vmem [shape: f32[16,32], index: 0, kind: input, shape index: {}]
  %s1 = inlined_call_operand.vmem [shape: f32[16,2], index: 1, kind: input, shape index: {}]
  %s2 = inlined_call_operand.vmem [shape: f32[16,8], index: 2, kind: input, shape index: {}]
  %s3 = inlined_call_operand.vmem [shape: f32[32,1], index: 3, kind: input, shape index: {}]
  %s4 = inlined_call_operand.vmem [shape: f32[2,1], index: 4, kind: input, shape index: {}]
  %s5 = inlined_call_operand.vmem [shape: f32[8,1], index: 5, kind: input, shape index: {}]
  %s6 = inlined_call_operand.<no memory space> [shape: f32[1,1], index: 6, kind: input, shape index: {}]
  %s7 = inlined_call_operand.vmem [shape: f32[16,1], index: 7, kind: output, shape index: {}]
  %s8 = sld [smem:[#allocation0]]
  $region38: #{tpu_custom_call.1} parent=0
    _
  %s10 = ssub.s32 1, %s8
  %s11 = scalar_select 0, %s10, %s8
  %12 = sst [smem:[#allocation2]] %s6
  // Predicated region
  $region2: #{tpu_custom_call.1} parent=0 // pred_check
    _
  $region3: #{tpu_custom_call.1} parent=0 // pred_check_branch
    %14 = sbr.rel (0) target = $region5
  $region4: #{tpu_custom_call.1} parent=0 // pred_region
    _
  $region5: #{tpu_custom_call.1} parent=0 // pred_fallthru
    _
  // Predicated region
  $region6: #{tpu_custom_call.1} parent=0 // pred_check
    _
  $region7: #{tpu_custom_call.1} parent=0 // pred_check_branch
    %16 = sbr.rel (0) target = $region9
  $region8: #{tpu_custom_call.1} parent=0 // pred_region
    _
  $region9: #{tpu_custom_call.1} parent=0 // pred_fallthru
    _
  // Predicated region
  $region10: #{tpu_custom_call.1} parent=0 // pred_check
    _
  $region11: #{tpu_custom_call.1} parent=0 // pred_check_branch
    %18 = sbr.rel (0) target = $region13
  $region12: #{tpu_custom_call.1} parent=0 // pred_region
    _
  $region13: #{tpu_custom_call.1} parent=0 // pred_fallthru
    _
  // Predicated region
  $region14: #{tpu_custom_call.1} parent=0 // pred_check
    _
  $region15: #{tpu_custom_call.1} parent=0 // pred_check_branch
    %20 = sbr.rel (0) target = $region17
  $region16: #{tpu_custom_call.1} parent=0 // pred_region
    _
  $region17: #{tpu_custom_call.1} parent=0 // pred_fallthru
    _
  // Predicated region
  $region18: #{tpu_custom_call.1} parent=0 // pred_check
    _
  $region19: #{tpu_custom_call.1} parent=0 // pred_check_branch
    %22 = sbr.rel (0) target = $region21
  $region20: #{tpu_custom_call.1} parent=0 // pred_region
    _
  $region21: #{tpu_custom_call.1} parent=0 // pred_fallthru
    _
  // Predicated region
  $region22: #{tpu_custom_call.1} parent=0 // pred_check
    _
  $region23: #{tpu_custom_call.1} parent=0 // pred_check_branch
    %24 = sbr.rel (0) target = $region25
  $region24: #{tpu_custom_call.1} parent=0 // pred_region
    _
  $region25: #{tpu_custom_call.1} parent=0 // pred_fallthru
    _
  // Predicated region
  $region26: #{tpu_custom_call.1} parent=0 // pred_check
    _
  $region27: #{tpu_custom_call.1} parent=0 // pred_check_branch
    %26 = sbr.rel (0) target = $region29
  $region28: #{tpu_custom_call.1} parent=0 // pred_region
    _
  $region29: #{tpu_custom_call.1} parent=0 // pred_fallthru
    _
  %v27 = vld [vmem:[%s0] sm:$0xff]
  %v28 = vld [vmem:[%s0 + $0x8] sm:$0xff]
  %v29 = vld [vmem:[%s3] sm:$0xff]
  %v30 = vld [vmem:[%s3 + $0x8] sm:$0xff]
  %v31 = vld [vmem:[%s3 + $0x10] sm:$0xff]
  %v32 = vld [vmem:[%s3 + $0x18] sm:$0xff]
  %v33 = vld [vmem:[%s1] sm:$0xff]
  %v34 = vld [vmem:[%s1 + $0x8] sm:$0xff]
  %v35 = vld [vmem:[%s4] sm:$0x3]
  %vm36 = vcmask 15360
  %v38 = vsel %vm36, %v33, 0
  %v41 = vsel %vm36, %v34, 0
  %vm43 = vcmask 1041408
  %v45 = vsel %vm43, %v35, 0
  %47 = vmatpush.msra.mxu0 0.0
  %48 = vmatpush.msra.mxu0 0.0
  %49 = vmatpush.msra.mxu0 0.0
  %50 = vmatpush.msra.mxu0 0.0
  %51 = vmatpush.msra.mxu0 0.0
  %52 = vmatpush.msra.mxu0 0.0
  %53 = vmatpush.msra.mxu0 0.0
  %54 = vmatpush.msra.mxu0 0.0
  %55 = vmatpush.msra.mxu0 0.0
  %56 = vmatpush.msra.mxu0 0.0
  %57 = vmatpush.msra.mxu0 0.0
  %58 = vmatpush.msra.mxu0 0.0
  %59 = vmatpush.msra.mxu0 0.0
  %60 = vmatpush.msra.mxu0 0.0
  %61 = vmatpush.msra.mxu0 0.0
  %62 = vmatpush.msra.mxu0 %v45
  %63 = vmatmul.f32.gmra.mxu0 %v38
  %v64 = vpop.f32.mrf.mxu0
  %v65 = vadd.f32 0.0, %v64
  %66 = vmatmul.f32.gmra.mxu0 %v41
  %v67 = vpop.f32.mrf.mxu0
  %v68 = vadd.f32 0.0, %v67
  %69 = vdwg.mxu0
  %vm70 = vcmask 261120
  %v72 = vsel %vm70, %v27, 0
  %v75 = vsel %vm70, %v28, 0
  %77 = vmatpush.msra.mxu0 0.0
  %78 = vmatpush.msra.mxu0 0.0
  %79 = vmatpush.msra.mxu0 0.0
  %80 = vmatpush.msra.mxu0 0.0
  %81 = vmatpush.msra.mxu0 0.0
  %82 = vmatpush.msra.mxu0 0.0
  %83 = vmatpush.msra.mxu0 0.0
  %84 = vmatpush.msra.mxu0 0.0
  %85 = vmatpush.msra.mxu0 0.0
  %86 = vmatpush.msra.mxu0 0.0
  %87 = vmatpush.msra.mxu0 0.0
  %88 = vmatpush.msra.mxu0 0.0
  %89 = vmatpush.msra.mxu0 %v32
  %90 = vmatpush.msra.mxu0 %v31
  %91 = vmatpush.msra.mxu0 %v30
  %92 = vmatpush.msra.mxu0 %v29
  %93 = vmatmul.f32.gmra.mxu0 %v72
  %v94 = vpop.f32.mrf.mxu0
  %v95 = vadd.f32 %v65, %v94
  %96 = vmatmul.f32.gmra.mxu0 %v75
  %v97 = vpop.f32.mrf.mxu0
  %v98 = vadd.f32 %v68, %v97
  %99 = vdwg.mxu0
  %v100 = vld [vmem:[%s2] sm:$0xff]
  %v101 = vld [vmem:[%s2 + $0x8] sm:$0xff]
  %v102 = vld [vmem:[%s5] sm:$0xff]
  %vm103 = vcmask 64512
  %v105 = vsel %vm103, %v100, 0
  %v108 = vsel %vm103, %v101, 0
  %110 = vmatpush.msra.mxu0 0.0
  %111 = vmatpush.msra.mxu0 0.0
  %112 = vmatpush.msra.mxu0 0.0
  %113 = vmatpush.msra.mxu0 0.0
  %114 = vmatpush.msra.mxu0 0.0
  %115 = vmatpush.msra.mxu0 0.0
  %116 = vmatpush.msra.mxu0 0.0
  %117 = vmatpush.msra.mxu0 0.0
  %118 = vmatpush.msra.mxu0 0.0
  %119 = vmatpush.msra.mxu0 0.0
  %120 = vmatpush.msra.mxu0 0.0
  %121 = vmatpush.msra.mxu0 0.0
  %122 = vmatpush.msra.mxu0 0.0
  %123 = vmatpush.msra.mxu0 0.0
  %124 = vmatpush.msra.mxu0 0.0
  %125 = vmatpush.msra.mxu0 %v102
  %126 = vmatmul.f32.gmra.mxu0 %v105
  %v127 = vpop.f32.mrf.mxu0
  %v128 = vadd.f32 0.0, %v127
  %129 = vmatmul.f32.gmra.mxu0 %v108
  %v130 = vpop.f32.mrf.mxu0
  %v131 = vadd.f32 0.0, %v130
  %132 = vdwg.mxu0
  %v133 = vadd.f32 %v95, %v128
  %v134 = vadd.f32 %v98, %v131
  %s135 = sld [smem:[#allocation2]]
  %v136 = vstv %s135
  %v137 = vadd.f32 %v133, %v136
  %v138 = vadd.f32 %v134, %v136
  %vm139 = vcmask 7168
  %140 = vst.msk [vmem:[%s7] sm:$0xff] %vm139, %v137
  %141 = vst.msk [vmem:[%s7 + $0x8] sm:$0xff] %vm139, %v138
  // Predicated region
  $region30: #{tpu_custom_call.1} parent=0 // pred_check
    _
  $region31: #{tpu_custom_call.1} parent=0 // pred_check_branch
    %143 = sbr.rel (0) target = $region33
  $region32: #{tpu_custom_call.1} parent=0 // pred_region
    _
  $region33: #{tpu_custom_call.1} parent=0 // pred_fallthru
    _
  // Predicated region
  $region34: #{tpu_custom_call.1} parent=0 // pred_check
    _
  $region35: #{tpu_custom_call.1} parent=0 // pred_check_branch
    %145 = sbr.rel (0) target = $region37
  $region36: #{tpu_custom_call.1} parent=0 // pred_region
    _
  $region37: #{tpu_custom_call.1} parent=0 // pred_fallthru
    _

</llo_original>
